<compile_context>
chip_gen: v6e
topology: v6e:2x2x1
jax: 0.10.0
libtpu: 0.0.40
codegen_flags: <defaults>
</compile_context>

<pallas_src>
import functools

import jax
import jax.numpy as jnp
from jax.experimental import pallas as pl
from jax.experimental.pallas import tpu as pltpu


# ----------------------------------------------------------------------------
# Synthetic config (mirrors the shapes implied by LocNetAB.__init__)
# ----------------------------------------------------------------------------
NUM_CLASSES = 5
P = NUM_CLASSES + 3                       # num_pred_value = 8
LEVELS = ("AL1", "AL2", "AL3", "AL4", "AL5", "AL6")
NUM_DBOX = {"AL1": 3, "AL2": 2, "AL3": 2, "AL4": 2, "AL5": 2, "AL6": 2}
FEAT_DIM = {lvl: 32 for lvl in LEVELS}    # CON1..CON6_FEAT_DIM
SEQ_LEN = {"AL1": 16, "AL2": 16, "AL3": 8, "AL4": 8, "AL5": 4, "AL6": 4}
BATCH = 2

CIN = 32
K_TAPS = 3
K_IM2COL = K_TAPS * CIN                   # 96

LENS = [SEQ_LEN[l] for l in LEVELS]       # [16, 16, 8, 8, 4, 4]
NBOX = [NUM_DBOX[l] for l in LEVELS]      # [3, 2, 2, 2, 2, 2]
COUT = [nb * P for nb in NBOX]            # [24, 16, 16, 16, 16, 16]

# Packed column offsets (lane axis) for the six heads, padded to 128 lanes.
COL_OFF = []
_off = 0
for _c in COUT:
    COL_OFF.append(_off)
    _off += _c
TOTAL_COUT = _off                         # 104
N_PACKED = 128                            # lane-dense output width

# Packed row offsets: rows ordered (level, batch, t).
ROW_OFF = []
_off = 0
for _L in LENS:
    ROW_OFF.append(_off)
    _off += BATCH * _L
TOTAL_ROWS = _off                         # 112 (multiple of 8)


# ----------------------------------------------------------------------------
# Pallas kernel: one fused im2col matmul + bias for all heads and the batch.
# ----------------------------------------------------------------------------
def _locnet_fused_kernel(x_ref, w_ref, b_ref, o_ref):
    # x_ref: (112, 96)   im2col rows for every (level, batch, t)
    # w_ref: (96, 128)   packed im2col weights (zero-padded lanes 104..127)
    # b_ref: (1, 128)    packed biases
    # o_ref: (112, 128)  lane-dense packed conv outputs
    acc = jnp.dot(x_ref[...], w_ref[...], preferred_element_type=jnp.float32)
    o_ref[...] = (acc + b_ref[...]).astype(o_ref.dtype)


def _fused_conv_matmul(x_all, w_all, b_all):
    m = x_all.shape[0]
    return pl.pallas_call(
        _locnet_fused_kernel,
        out_shape=jax.ShapeDtypeStruct((m, N_PACKED), jnp.float32),
        grid_spec=pltpu.PrefetchScalarGridSpec(
            num_scalar_prefetch=0,
            grid=(1,),
            in_specs=[
                pl.BlockSpec((m, K_IM2COL), lambda i: (0, 0)),
                pl.BlockSpec((K_IM2COL, N_PACKED), lambda i: (0, 0)),
                pl.BlockSpec((1, N_PACKED), lambda i: (0, 0)),
            ],
            out_specs=pl.BlockSpec((m, N_PACKED), lambda i: (0, 0)),
        ),
        compiler_params=pltpu.CompilerParams(
            dimension_semantics=("arbitrary",)),
    )(x_all, w_all, b_all)


# ----------------------------------------------------------------------------
# Parameters
# ----------------------------------------------------------------------------
def init_params(key):
    """PyTorch-layout Conv1d params: w (Cout, Cin, 3), b (Cout,) per head."""
    params = {}
    for i, level in enumerate(LEVELS):
        cin = FEAT_DIM[level]
        cout = NUM_DBOX[level] * P
        kw, kb = jax.random.split(jax.random.fold_in(key, i))
        bound = 1.0 / jnp.sqrt(cin * 3.0)
        w = jax.random.uniform(kw, (cout, cin, 3), jnp.float32, -bound, bound)
        b = jax.random.uniform(kb, (cout,), jnp.float32, -bound, bound)
        params[f"pred{i + 1}"] = (w, b)
    return params


def pack_params(params):
    """One-time repack of the six Conv1d heads into a single lane-dense
    (96, 128) im2col weight slab + (1, 128) bias row."""
    w_cols, b_cols = [], []
    for i in range(len(LEVELS)):
        w, b = params[f"pred{i + 1}"]                 # (Cout, Cin, 3), (Cout,)
        # (Cout, Cin, 3) -> (3, Cin, Cout) -> (3*Cin, Cout); row k*Cin+c == w[o,c,k]
        w_cols.append(jnp.transpose(w, (2, 1, 0)).reshape(K_IM2COL, -1))
        b_cols.append(b)
    w_all = jnp.concatenate(w_cols, axis=1)           # (96, 104)
    b_all = jnp.concatenate(b_cols, axis=0)           # (104,)
    pad = N_PACKED - TOTAL_COUT
    w_all = jnp.pad(w_all, ((0, 0), (0, pad)))        # (96, 128)
    b_all = jnp.pad(b_all, ((0, pad),)).reshape(1, N_PACKED)
    return w_all, b_all


# ----------------------------------------------------------------------------
# Forward (single jit: im2col glue + one pallas_call + tensor_view reshapes)
# ----------------------------------------------------------------------------
def _im2col_level(x_ncl, seq_len):
    """(B, Cin, L) NCL input -> (B*L, 3*Cin) im2col rows, zero-padded edges."""
    x_nlc = jnp.transpose(x_ncl, (0, 2, 1))           # (B, L, Cin)
    x_pad = jnp.pad(x_nlc, ((0, 0), (1, 1), (0, 0)))  # (B, L+2, Cin)
    taps = jnp.concatenate(
        [x_pad[:, 0:seq_len],
         x_pad[:, 1:seq_len + 1],
         x_pad[:, 2:seq_len + 2]], axis=-1)           # (B, L, 96)
    return taps.reshape(BATCH * seq_len, K_IM2COL)


@jax.jit
def locnet_ab_forward(w_all, b_all, feat_list_ncl):
    """feat_list_ncl: list of 6 arrays in PyTorch NCL layout (B, 32, L)."""
    # Build one im2col activation matrix covering all 6 levels and the batch.
    x_all = jnp.concatenate(
        [_im2col_level(x, L) for x, L in zip(feat_list_ncl, LENS)], axis=0)
    y = _fused_conv_matmul(x_all, w_all, b_all)       # (112, 128), Pallas

    # Per-level slice + tensor_view.  Packed element y[r0 + b*L + t, c0 + nb*P + p]
    # equals PyTorch conv output [b, nb*P + p, t], so the PyTorch
    # (B, num_box*P, L) -> (B, L*num_box, P) view is a plain reshape here.
    outs = []
    for i in range(len(LEVELS)):
        L, cout, nbox = LENS[i], COUT[i], NBOX[i]
        r0, c0 = ROW_OFF[i], COL_OFF[i]
        blk = y[r0:r0 + BATCH * L, c0:c0 + cout]      # (B*L, nbox*P)
        outs.append(blk.reshape(BATCH, L * nbox, P))
    return tuple(outs)


# ----------------------------------------------------------------------------
# Pure-JAX reference (correctness check only)
# ----------------------------------------------------------------------------
def _ref_conv1d_k3(x_ncl, w, b):
    y = jax.lax.conv_general_dilated(
        x_ncl, w, window_strides=(1,), padding=((1, 1),),
        dimension_numbers=("NCH", "OIH", "NCH"))
    return y + b[None, :, None]


def _ref_forward(params, feat_list_ncl):
    outs = []
    for i, x_ncl in enumerate(feat_list_ncl):
        w, b = params[f"pred{i + 1}"]
        y = _ref_conv1d_k3(x_ncl, w, b)               # (B, num_box*P, L)
        B, C, L = y.shape
        num_box = C // P
        y = y.reshape(B, num_box, P, L)
        y = jnp.transpose(y, (0, 3, 1, 2)).reshape(B, L * num_box, P)
        outs.append(y)
    return tuple(outs)


if __name__ == "__main__":
    key = jax.random.PRNGKey(0)
    pkey, xkey = jax.random.split(key)
    params = init_params(pkey)
    w_all, b_all = pack_params(params)                # one-time repack

    feats = []
    for i, level in enumerate(LEVELS):
        k = jax.random.fold_in(xkey, i)
        feats.append(jax.random.normal(
            k, (BATCH, FEAT_DIM[level], SEQ_LEN[level]), jnp.float32))

    outs = locnet_ab_forward(w_all, b_all, feats)
    outs = jax.block_until_ready(outs)

    refs = _ref_forward(params, feats)
    for o, r in zip(outs, refs):
        assert o.shape == r.shape, (o.shape, r.shape)
        assert jnp.allclose(o, r, atol=1e-4, rtol=1e-4)

    print("KERNEL_OK")
</pallas_src>

<mosaic_0001>
module attributes {stable_mosaic.version = 11 : i64} {
  func.func @_locnet_fused_kernel(%arg0: i32, %arg1: memref<112x96xf32, #tpu.memory_space<vmem>>, %arg2: memref<96x128xf32, #tpu.memory_space<vmem>>, %arg3: memref<1x128xf32, #tpu.memory_space<vmem>>, %arg4: memref<112x128xf32, #tpu.memory_space<vmem>>) attributes {dimension_semantics = [#tpu.dimension_semantics<arbitrary>], iteration_bounds = array<i64: 1>, scalar_prefetch = 0 : i64, scratch_operands = 0 : i64, tpu.core_type = #tpu.core_type<tc>, window_params = [{pipeline_mode = #tpu.pipeline_mode<synchronous>, transform_indices = @transform_0, window_bounds = array<i64: 112, 96>}, {pipeline_mode = #tpu.pipeline_mode<synchronous>, transform_indices = @transform_1, window_bounds = array<i64: 96, 128>}, {pipeline_mode = #tpu.pipeline_mode<synchronous>, transform_indices = @transform_2, window_bounds = array<i64: 1, 128>}, {pipeline_mode = #tpu.pipeline_mode<synchronous>, transform_indices = @transform_3, window_bounds = array<i64: 112, 128>}]} {
    %c0 = arith.constant 0 : index
    %c0_0 = arith.constant 0 : index
    %0 = vector.load %arg1[%c0, %c0_0] : memref<112x96xf32, #tpu.memory_space<vmem>>, vector<112x96xf32>
    %c0_1 = arith.constant 0 : index
    %c0_2 = arith.constant 0 : index
    %1 = vector.load %arg2[%c0_1, %c0_2] : memref<96x128xf32, #tpu.memory_space<vmem>>, vector<96x128xf32>
    %cst = arith.constant dense<0.000000e+00> : vector<112x128xf32>
    %2 = tpu.matmul %0, %1, %cst {dimension_numbers = #tpu.dot_dimension_numbers<[1], [0], [0], [1], [0, 0, 1, 1], [], []>} : vector<112x96xf32>, vector<96x128xf32>, vector<112x128xf32> -> vector<112x128xf32>
    %c0_3 = arith.constant 0 : index
    %c0_4 = arith.constant 0 : index
    %3 = vector.load %arg3[%c0_3, %c0_4] : memref<1x128xf32, #tpu.memory_space<vmem>>, vector<1x128xf32>
    %4 = vector.broadcast %3 : vector<1x128xf32> to vector<112x128xf32>
    %5 = arith.addf %2, %4 : vector<112x128xf32>
    %c0_5 = arith.constant 0 : index
    %c0_6 = arith.constant 0 : index
    %6 = vector.load %arg4[%c0_5, %c0_6] : memref<112x128xf32, #tpu.memory_space<vmem>>, vector<112x128xf32>
    tpu.vector_store %arg4[%c0_5, %c0_6], %5 {strides = array<i32>} : memref<112x128xf32, #tpu.memory_space<vmem>>, vector<112x128xf32>,
    return
  }
  func.func @transform_0(%arg0: i32) -> (i32, i32) {
    %c0_i32 = arith.constant 0 : i32
    %c0_i32_0 = arith.constant 0 : i32
    %c0_i32_1 = arith.constant 0 : i32
    return %c0_i32, %c0_i32_0 : i32, i32
  }
  func.func @transform_1(%arg0: i32) -> (i32, i32) {
    %c0_i32 = arith.constant 0 : i32
    %c0_i32_0 = arith.constant 0 : i32
    %c0_i32_1 = arith.constant 0 : i32
    return %c0_i32, %c0_i32_0 : i32, i32
  }
  func.func @transform_2(%arg0: i32) -> (i32, i32) {
    %c0_i32 = arith.constant 0 : i32
    %c0_i32_0 = arith.constant 0 : i32
    %c0_i32_1 = arith.constant 0 : i32
    return %c0_i32, %c0_i32_0 : i32, i32
  }
  func.func @transform_3(%arg0: i32) -> (i32, i32) {
    %c0_i32 = arith.constant 0 : i32
    %c0_i32_0 = arith.constant 0 : i32
    %c0_i32_1 = arith.constant 0 : i32
    return %c0_i32, %c0_i32_0 : i32, i32
  }
}

</mosaic_0001>

<llo_original>
// kernel: locnet_ab_forward.1
$region0: #{locnet_ab_forward.1}
  #allocation0 [shape = 'u32[]', space=smem, size = 0x4, offset = 0x4, fixed_abs, tag = 'smem constant byte address 0x4 - core index']
  #allocation1 [shape = 'u32[144,128]{1,0:T(1,128)}', space=vmem, size = 0x12000, scoped, tag = 'internal scratch']
  %s0 = inlined_call_operand.vmem [shape: f32[112,96], index: 0, kind: input, shape index: {}]
  %s1 = inlined_call_operand.vmem [shape: f32[96,128], index: 1, kind: input, shape index: {}]
  %s2 = inlined_call_operand.vmem [shape: f32[1,128], index: 2, kind: input, shape index: {}]
  %s3 = inlined_call_operand.vmem [shape: f32[112,128], index: 3, kind: output, shape index: {}]
  %s4 = sld [smem:[#allocation0]]
  $region22: #{locnet_ab_forward.1} parent=0
    _
  %s6 = ssub.s32 1, %s4
  %s7 = scalar_select 0, %s6, %s4
  // Predicated region
  $region2: #{locnet_ab_forward.1} parent=0 // pred_check
    _
  $region3: #{locnet_ab_forward.1} parent=0 // pred_check_branch
    %9 = sbr.rel (0) target = $region5
  $region4: #{locnet_ab_forward.1} parent=0 // pred_region
    _
  $region5: #{locnet_ab_forward.1} parent=0 // pred_fallthru
    _
  // Predicated region
  $region6: #{locnet_ab_forward.1} parent=0 // pred_check
    _
  $region7: #{locnet_ab_forward.1} parent=0 // pred_check_branch
    %11 = sbr.rel (0) target = $region9
  $region8: #{locnet_ab_forward.1} parent=0 // pred_region
    _
  $region9: #{locnet_ab_forward.1} parent=0 // pred_fallthru
    _
  // Predicated region
  $region10: #{locnet_ab_forward.1} parent=0 // pred_check
    _
  $region11: #{locnet_ab_forward.1} parent=0 // pred_check_branch
    %13 = sbr.rel (0) target = $region13
  $region12: #{locnet_ab_forward.1} parent=0 // pred_region
    _
  $region13: #{locnet_ab_forward.1} parent=0 // pred_fallthru
    _
  %v14 = vld [vmem:[%s0] sm:$0xff]
  %v15 = vld [vmem:[%s0 + $0x8] sm:$0xff]
  %v16 = vld [vmem:[%s0 + $0x10] sm:$0xff]
  %v17 = vld [vmem:[%s0 + $0x18] sm:$0xff]
  %v18 = vld [vmem:[%s0 + $0x20] sm:$0xff]
  %v19 = vld [vmem:[%s0 + $0x28] sm:$0xff]
  %v20 = vld [vmem:[%s0 + $0x30] sm:$0xff]
  %v21 = vld [vmem:[%s0 + $0x38] sm:$0xff]
  %v22 = vld [vmem:[%s0 + $0x40] sm:$0xff]
  %v23 = vld [vmem:[%s0 + $0x48] sm:$0xff]
  %v24 = vld [vmem:[%s0 + $0x50] sm:$0xff]
  %v25 = vld [vmem:[%s0 + $0x58] sm:$0xff]
  %v26 = vld [vmem:[%s0 + $0x60] sm:$0xff]
  %v27 = vld [vmem:[%s0 + $0x68] sm:$0xff]
  %v28 = vld [vmem:[%s1] sm:$0xff]
  %v29 = vld [vmem:[%s1 + $0x8] sm:$0xff]
  %v30 = vld [vmem:[%s1 + $0x10] sm:$0xff]
  %v31 = vld [vmem:[%s1 + $0x18] sm:$0xff]
  %v32 = vld [vmem:[%s1 + $0x20] sm:$0xff]
  %v33 = vld [vmem:[%s1 + $0x28] sm:$0xff]
  %v34 = vld [vmem:[%s1 + $0x30] sm:$0xff]
  %v35 = vld [vmem:[%s1 + $0x38] sm:$0xff]
  %v36 = vld [vmem:[%s1 + $0x40] sm:$0xff]
  %v37 = vld [vmem:[%s1 + $0x48] sm:$0xff]
  %v38 = vld [vmem:[%s1 + $0x50] sm:$0xff]
  %v39 = vld [vmem:[%s1 + $0x58] sm:$0xff]
  %v40 = vld [vmem:[%s2] sm:$0x1]
  %v42 = vlaneseq
  %v43 = vshrl.u32 %v42, 7
  %v44 = vsub.s32 0, %v43
  %v45 = vrot.slane %v40, %v44
  %vm47 = vcmask 785408
  %v49 = vsel %vm47, %v14, 0
  %v52 = vsel %vm47, %v15, 0
  %v55 = vsel %vm47, %v16, 0
  %v58 = vsel %vm47, %v17, 0
  %v61 = vsel %vm47, %v18, 0
  %v64 = vsel %vm47, %v19, 0
  %v67 = vsel %vm47, %v20, 0
  %v70 = vsel %vm47, %v21, 0
  %v73 = vsel %vm47, %v22, 0
  %v76 = vsel %vm47, %v23, 0
  %v79 = vsel %vm47, %v24, 0
  %v82 = vsel %vm47, %v25, 0
  %v85 = vsel %vm47, %v26, 0
  %v88 = vsel %vm47, %v27, 0
  %90 = vmatprep.subr.mxu0 0.0
  %91 = vmatpush1.msra.mxu0 0.0
  %92 = vmatprep.subr.mxu0 0.0
  %93 = vmatpush1.msra.mxu0 0.0
  %94 = vmatprep.subr.mxu0 0.0
  %95 = vmatpush1.msra.mxu0 0.0
  %96 = vmatprep.subr.mxu0 0.0
  %97 = vmatpush1.msra.mxu0 0.0
  %98 = vmatprep.subr.mxu0 0.0
  %99 = vmatpush1.msra.mxu0 %v39
  %100 = vmatprep.subr.mxu0 0.0
  %101 = vmatpush1.msra.mxu0 %v38
  %102 = vmatprep.subr.mxu0 0.0
  %103 = vmatpush1.msra.mxu0 %v37
  %104 = vmatprep.subr.mxu0 0.0
  %105 = vmatpush1.msra.mxu0 %v36
  %106 = vmatprep.subr.mxu0 0.0
  %107 = vmatpush1.msra.mxu0 %v35
  %108 = vmatprep.subr.mxu0 0.0
  %109 = vmatpush1.msra.mxu0 %v34
  %110 = vmatprep.subr.mxu0 0.0
  %111 = vmatpush1.msra.mxu0 %v33
  %112 = vmatprep.subr.mxu0 0.0
  %113 = vmatpush1.msra.mxu0 %v32
  %114 = vmatprep.subr.mxu0 0.0
  %115 = vmatpush1.msra.mxu0 %v31
  %116 = vmatprep.subr.mxu0 0.0
  %117 = vmatpush1.msra.mxu0 %v30
  %118 = vmatprep.subr.mxu0 0.0
  %119 = vmatpush1.msra.mxu0 %v29
  %120 = vmatprep.subr.mxu0 0.0
  %121 = vmatpush1.msra.mxu0 %v28
  %122 = vmatprep.subr.mxu0 0.0
  %123 = vmatpush2.msra.mxu0 0.0
  %124 = vmatprep.subr.mxu0 0.0
  %125 = vmatpush2.msra.mxu0 0.0
  %126 = vmatprep.subr.mxu0 0.0
  %127 = vmatpush2.msra.mxu0 0.0
  %128 = vmatprep.subr.mxu0 0.0
  %129 = vmatpush2.msra.mxu0 0.0
  %130 = vmatprep.subr.mxu0 0.0
  %131 = vmatpush2.msra.mxu0 0.0
  %132 = vmatprep.subr.mxu0 0.0
  %133 = vmatpush2.msra.mxu0 0.0
  %134 = vmatprep.subr.mxu0 0.0
  %135 = vmatpush2.msra.mxu0 0.0
  %136 = vmatprep.subr.mxu0 0.0
  %137 = vmatpush2.msra.mxu0 0.0
  %138 = vmatprep.subr.mxu0 0.0
  %139 = vmatpush2.msra.mxu0 0.0
  %140 = vmatprep.subr.mxu0 0.0
  %141 = vmatpush2.msra.mxu0 0.0
  %142 = vmatprep.subr.mxu0 0.0
  %143 = vmatpush2.msra.mxu0 0.0
  %144 = vmatprep.subr.mxu0 0.0
  %145 = vmatpush2.msra.mxu0 0.0
  %146 = vmatprep.subr.mxu0 0.0
  %147 = vmatpush2.msra.mxu0 0.0
  %148 = vmatprep.subr.mxu0 0.0
  %149 = vmatpush2.msra.mxu0 0.0
  %150 = vmatprep.subr.mxu0 0.0
  %151 = vmatpush2.msra.mxu0 0.0
  %152 = vmatprep.subr.mxu0 0.0
  %153 = vmatpush2.msra.mxu0 0.0
  %154 = vmatprep.mubr.f32.mxu0 0.0
  %155 = vmatmul.mubr.f32.gmra.mxu0 %v49
  %v156 = vpop.f32.mrf.mxu0
  %v157 = vadd.f32 %v45, %v156
  %v158 = vpop.f32.mrf.mxu0
  %159 = vmatprep.mubr.f32.mxu0 0.0
  %160 = vmatmul.mubr.f32.gmra.mxu0 %v52
  %v161 = vpop.f32.mrf.mxu0
  %v162 = vadd.f32 %v45, %v161
  %v163 = vpop.f32.mrf.mxu0
  %164 = vmatprep.mubr.f32.mxu0 0.0
  %165 = vmatmul.mubr.f32.gmra.mxu0 %v55
  %v166 = vpop.f32.mrf.mxu0
  %v167 = vadd.f32 %v45, %v166
  %v168 = vpop.f32.mrf.mxu0
  %169 = vmatprep.mubr.f32.mxu0 0.0
  %170 = vmatmul.mubr.f32.gmra.mxu0 %v58
  %v171 = vpop.f32.mrf.mxu0
  %v172 = vadd.f32 %v45, %v171
  %v173 = vpop.f32.mrf.mxu0
  %174 = vmatprep.mubr.f32.mxu0 0.0
  %175 = vmatmul.mubr.f32.gmra.mxu0 %v61
  %v176 = vpop.f32.mrf.mxu0
  %v177 = vadd.f32 %v45, %v176
  %v178 = vpop.f32.mrf.mxu0
  %179 = vmatprep.mubr.f32.mxu0 0.0
  %180 = vmatmul.mubr.f32.gmra.mxu0 %v64
  %v181 = vpop.f32.mrf.mxu0
  %v182 = vadd.f32 %v45, %v181
  %v183 = vpop.f32.mrf.mxu0
  %184 = vmatprep.mubr.f32.mxu0 0.0
  %185 = vmatmul.mubr.f32.gmra.mxu0 %v67
  %v186 = vpop.f32.mrf.mxu0
  %v187 = vadd.f32 %v45, %v186
  %v188 = vpop.f32.mrf.mxu0
  %189 = vmatprep.mubr.f32.mxu0 0.0
  %190 = vmatmul.mubr.f32.gmra.mxu0 %v70
  %v191 = vpop.f32.mrf.mxu0
  %v192 = vadd.f32 %v45, %v191
  %v193 = vpop.f32.mrf.mxu0
  %194 = vmatprep.mubr.f32.mxu0 0.0
  %195 = vmatmul.mubr.f32.gmra.mxu0 %v73
  %v196 = vpop.f32.mrf.mxu0
  %v197 = vadd.f32 %v45, %v196
  %v198 = vpop.f32.mrf.mxu0
  %199 = vmatprep.mubr.f32.mxu0 0.0
  %200 = vmatmul.mubr.f32.gmra.mxu0 %v76
  %v201 = vpop.f32.mrf.mxu0
  %v202 = vadd.f32 %v45, %v201
  %v203 = vpop.f32.mrf.mxu0
  %204 = vmatprep.mubr.f32.mxu0 0.0
  %205 = vmatmul.mubr.f32.gmra.mxu0 %v79
  %v206 = vpop.f32.mrf.mxu0
  %v207 = vadd.f32 %v45, %v206
  %v208 = vpop.f32.mrf.mxu0
  %209 = vmatprep.mubr.f32.mxu0 0.0
  %210 = vmatmul.mubr.f32.gmra.mxu0 %v82
  %v211 = vpop.f32.mrf.mxu0
  %v212 = vadd.f32 %v45, %v211
  %v213 = vpop.f32.mrf.mxu0
  %214 = vmatprep.mubr.f32.mxu0 0.0
  %215 = vmatmul.mubr.f32.gmra.mxu0 %v85
  %v216 = vpop.f32.mrf.mxu0
  %v217 = vadd.f32 %v45, %v216
  %v218 = vpop.f32.mrf.mxu0
  %219 = vmatprep.mubr.f32.mxu0 0.0
  %220 = vmatmul.mubr.f32.gmra.mxu0 %v88
  %v221 = vpop.f32.mrf.mxu0
  %v222 = vadd.f32 %v45, %v221
  %v223 = vpop.f32.mrf.mxu0
  %224 = vdwg.mxu0
  %225 = vst [vmem:[%s3] sm:$0xff] %v157
  %226 = vst [vmem:[%s3 + $0x8] sm:$0xff] %v162
  %227 = vst [vmem:[%s3 + $0x10] sm:$0xff] %v167
  %228 = vst [vmem:[%s3 + $0x18] sm:$0xff] %v172
  %229 = vst [vmem:[%s3 + $0x20] sm:$0xff] %v177
  %230 = vst [vmem:[%s3 + $0x28] sm:$0xff] %v182
  %231 = vst [vmem:[%s3 + $0x30] sm:$0xff] %v187
  %232 = vst [vmem:[%s3 + $0x38] sm:$0xff] %v192
  %233 = vst [vmem:[%s3 + $0x40] sm:$0xff] %v197
  %234 = vst [vmem:[%s3 + $0x48] sm:$0xff] %v202
  %235 = vst [vmem:[%s3 + $0x50] sm:$0xff] %v207
  %236 = vst [vmem:[%s3 + $0x58] sm:$0xff] %v212
  %237 = vst [vmem:[%s3 + $0x60] sm:$0xff] %v217
  %238 = vst [vmem:[%s3 + $0x68] sm:$0xff] %v222
  // Predicated region
  $region14: #{locnet_ab_forward.1} parent=0 // pred_check
    _
  $region15: #{locnet_ab_forward.1} parent=0 // pred_check_branch
    %240 = sbr.rel (0) target = $region17
  $region16: #{locnet_ab_forward.1} parent=0 // pred_region
    _
  $region17: #{locnet_ab_forward.1} parent=0 // pred_fallthru
    _
  // Predicated region
  $region18: #{locnet_ab_forward.1} parent=0 // pred_check
    _
  $region19: #{locnet_ab_forward.1} parent=0 // pred_check_branch
    %242 = sbr.rel (0) target = $region21
  $region20: #{locnet_ab_forward.1} parent=0 // pred_region
    _
  $region21: #{locnet_ab_forward.1} parent=0 // pred_fallthru
    _

</llo_original>
